<compile_context>
chip_gen: v5e
topology: v5e:2x2
jax: 0.10.0
libtpu: 0.0.40
codegen_flags: <defaults>
</compile_context>

<pallas_src>
import functools

import jax
import jax.numpy as jnp
from jax.experimental import pallas as pl
from jax.experimental.pallas import tpu as pltpu

MARGIN = 1.0

_MIB = 1024 * 1024


def _contrastive_loss_kernel(x1_ref, x2_ref, t_ref, out_ref, *,
                             margin, total_b, tile_b, ragged):
    # Upcast in-kernel (inputs may arrive as bf16); all arithmetic in f32.
    x1 = x1_ref[...].astype(jnp.float32)                    # (TB, D)
    x2 = x2_ref[...].astype(jnp.float32)                    # (TB, D)
    t = t_ref[...].astype(jnp.float32)                      # (TB, 1)

    diff = x1 - x2                                          # VPU
    d2 = jnp.sum(diff * diff, axis=-1, keepdims=True)       # (TB, 1) XLU lane reduce
    d = jnp.sqrt(d2)                                        # EUP
    hinge = jnp.maximum(margin - d, 0.0)                    # (TB, 1)
    per_pair = t * d2 + (1.0 - t) * hinge * hinge           # (TB, 1)

    if ragged:
        # Mask rows of the ragged last tile; garbage rows (inf/NaN) are
        # discarded by the select and never touched arithmetically afterwards.
        # (Only traced when B % tile_b != 0.)
        i = pl.program_id(0)
        row = jax.lax.broadcasted_iota(jnp.int32, per_pair.shape, 0)
        valid = (i * tile_b + row) < total_b
        per_pair = jnp.where(valid, per_pair, 0.0)

    # One partial sum per tile; reduced (and scaled by 0.5/B) in the wrapper.
    out_ref[...] = jnp.sum(per_pair).reshape(1, 1, 1)


def _vmem_capacity_bytes() -> int:
    """Physical VMEM per TensorCore; conservative (v7x) fallback."""
    try:
        info = pltpu.get_tpu_info()
        cap = getattr(info, "vmem_capacity_bytes", None)
        if cap:
            return int(cap)
    except Exception:
        pass
    return 64 * _MIB


def contrastive_loss(input1: jax.Array, input2: jax.Array, target: jax.Array,
                     margin: float = MARGIN, tile_b: int | None = None) -> jax.Array:
    """input1, input2: (B, D) float (f32/bf16); target: (B,) in {0,1}. Scalar f32."""
    B, D = input1.shape
    itemsize = jnp.dtype(input1.dtype).itemsize
    t2d = target.reshape(B, 1)

    # --- Per-generation budgets -------------------------------------------
    cap = _vmem_capacity_bytes()
    if cap >= 96 * _MIB:                 # v5e / v6e: 128 MiB physical VMEM
        tile_budget = 8 * _MIB           # per input tile (in the input dtype)
        vmem_ceiling = 96 * _MIB
    else:                                # v7x: 64 MiB physical VMEM
        tile_budget = 4 * _MIB
        vmem_ceiling = 48 * _MIB

    # Sublane packing of the input dtype: 8 rows (f32), 16 (bf16), 32 (int8/fp8).
    row_align = max(8, 8 * (4 // max(itemsize, 1)))

    # --- Batch tile --------------------------------------------------------
    if tile_b is None:
        bytes_per_row = max(D * itemsize, 1)
        tile_b = max(row_align, min(4096, tile_budget // bytes_per_row))
    tile_b = int(min(B, tile_b))
    if tile_b < B:
        tile_b = max(row_align, (tile_b // row_align) * row_align)
    num_tiles = pl.cdiv(B, tile_b)
    ragged = (B % tile_b) != 0

    # --- VMEM limit: 2 inputs x 2 pipeline buffers, lane-padded target, and
    # headroom for the f32 upcast temporaries of the elementwise chain. ------
    in_tile_bytes = tile_b * D * itemsize
    tgt_tile_bytes = tile_b * 128 * 4            # (tile_b, 1) f32 padded to 128 lanes
    f32_tmp_bytes = 3 * tile_b * D * 4           # x1/x2/diff in f32 inside the kernel
    footprint = 4 * in_tile_bytes + 2 * tgt_tile_bytes + f32_tmp_bytes
    vmem_limit = int(min(vmem_ceiling, max(16 * _MIB, footprint + 4 * _MIB)))

    kernel = functools.partial(
        _contrastive_loss_kernel, margin=float(margin), total_b=B,
        tile_b=tile_b, ragged=ragged)

    partials = pl.pallas_call(
        kernel,
        out_shape=jax.ShapeDtypeStruct((num_tiles, 1, 1), jnp.float32),
        grid_spec=pltpu.PrefetchScalarGridSpec(
            num_scalar_prefetch=0,
            grid=(num_tiles,),
            in_specs=[
                pl.BlockSpec((tile_b, D), lambda i: (i, 0)),
                pl.BlockSpec((tile_b, D), lambda i: (i, 0)),
                pl.BlockSpec((tile_b, 1), lambda i: (i, 0)),
            ],
            out_specs=pl.BlockSpec((1, 1, 1), lambda i: (i, 0, 0)),
        ),
        compiler_params=pltpu.CompilerParams(
            # Independent per-tile partials: shardable across v7x's two TCs.
            dimension_semantics=("parallel",),
            vmem_limit_bytes=vmem_limit,
        ),
    )(input1, input2, t2d)

    return (0.5 / float(B)) * jnp.sum(partials)


def _contrastive_loss_ref(input1, input2, target, margin: float = MARGIN):
    x1 = input1.astype(jnp.float32)
    x2 = input2.astype(jnp.float32)
    t = target.astype(jnp.float32)
    d2 = jnp.sum((x1 - x2) ** 2, axis=-1)
    d = jnp.sqrt(d2)
    hinge = jnp.maximum(margin - d, 0.0)
    return 0.5 * jnp.mean(t * d2 + (1.0 - t) * hinge * hinge)


if __name__ == "__main__":
    key = jax.random.PRNGKey(0)
    k1, k2, k3, k4, k5, k6, k7, k8, k9 = jax.random.split(key, 9)

    # 1) Small f32 case (single tile, block == full array).
    B, D = 8, 32
    x1 = jax.random.normal(k1, (B, D), dtype=jnp.float32)
    x2 = jax.random.normal(k2, (B, D), dtype=jnp.float32)
    t = jax.random.bernoulli(k3, p=0.5, shape=(B,)).astype(jnp.float32)
    loss = contrastive_loss(x1, x2, t)
    jax.block_until_ready(loss)
    ref = _contrastive_loss_ref(x1, x2, t)
    assert jnp.allclose(loss, ref, rtol=1e-5, atol=1e-6), (loss, ref)

    # 2) Evenly-divided multi-tile f32 case: 4 parallel per-tile partials,
    #    ragged mask skipped at trace time.
    B1, D1 = 512, 64
    w1 = jax.random.normal(k4, (B1, D1), dtype=jnp.float32)
    w2 = jax.random.normal(k5, (B1, D1), dtype=jnp.float32)
    t1 = jax.random.bernoulli(k6, p=0.5, shape=(B1,)).astype(jnp.float32)
    loss1 = contrastive_loss(w1, w2, t1, tile_b=128)
    jax.block_until_ready(loss1)
    ref1 = _contrastive_loss_ref(w1, w2, t1)
    assert jnp.allclose(loss1, ref1, rtol=1e-5, atol=1e-6), (loss1, ref1)

    # 3) bf16 case exercising batch tiling, in-kernel upcast, and the masked
    #    ragged last tile (1000 rows, tile 128 -> 8 tiles, last has 104).
    B2, D2 = 1000, 256
    y1 = jax.random.normal(k7, (B2, D2), dtype=jnp.bfloat16)
    y2 = jax.random.normal(k8, (B2, D2), dtype=jnp.bfloat16)
    t2 = jax.random.bernoulli(k9, p=0.5, shape=(B2,)).astype(jnp.float32)
    loss2 = contrastive_loss(y1, y2, t2, tile_b=128)
    jax.block_until_ready(loss2)
    ref2 = _contrastive_loss_ref(y1, y2, t2)
    assert jnp.allclose(loss2, ref2, rtol=1e-4, atol=1e-5), (loss2, ref2)

    print("KERNEL_OK")
</pallas_src>

<mosaic_0001>
module attributes {stable_mosaic.version = 11 : i64} {
  func.func @_contrastive_loss_kernel(%arg0: i32, %arg1: memref<8x32xf32, #tpu.memory_space<vmem>>, %arg2: memref<8x32xf32, #tpu.memory_space<vmem>>, %arg3: memref<8x1xf32, #tpu.memory_space<vmem>>, %arg4: memref<1x1x1xf32, #tpu.memory_space<vmem>>) attributes {dimension_semantics = [#tpu.dimension_semantics<parallel>], iteration_bounds = array<i64: 1>, scalar_prefetch = 0 : i64, scratch_operands = 0 : i64, tpu.core_type = #tpu.core_type<tc>, window_params = [{transform_indices = @transform_0, window_bounds = array<i64: 8, 32>}, {transform_indices = @transform_1, window_bounds = array<i64: 8, 32>}, {transform_indices = @transform_2, window_bounds = array<i64: 8, 1>}, {transform_indices = @transform_3, window_bounds = array<i64: 1, 1, 1>}]} {
    %c0 = arith.constant 0 : index
    %c0_0 = arith.constant 0 : index
    %0 = vector.load %arg1[%c0, %c0_0] : memref<8x32xf32, #tpu.memory_space<vmem>>, vector<8x32xf32>
    %c0_1 = arith.constant 0 : index
    %c0_2 = arith.constant 0 : index
    %1 = vector.load %arg2[%c0_1, %c0_2] : memref<8x32xf32, #tpu.memory_space<vmem>>, vector<8x32xf32>
    %c0_3 = arith.constant 0 : index
    %c0_4 = arith.constant 0 : index
    %2 = vector.load %arg3[%c0_3, %c0_4] : memref<8x1xf32, #tpu.memory_space<vmem>>, vector<8x1xf32>
    %3 = arith.subf %0, %1 : vector<8x32xf32>
    %4 = arith.mulf %3, %3 : vector<8x32xf32>
    %cst = arith.constant dense<0.000000e+00> : vector<8xf32>
    %5 = vector.multi_reduction <add>, %4, %cst [1] : vector<8x32xf32> to vector<8xf32>
    %6 = vector.shape_cast %5 : vector<8xf32> to vector<8x1xf32>
    %7 = math.sqrt %6 : vector<8x1xf32>
    %cst_5 = arith.constant 1.000000e+00 : f32
    %8 = vector.broadcast %cst_5 : f32 to vector<8x1xf32>
    %9 = arith.subf %8, %7 : vector<8x1xf32>
    %cst_6 = arith.constant 0.000000e+00 : f32
    %10 = vector.broadcast %cst_6 : f32 to vector<8x1xf32>
    %11 = arith.maximumf %9, %10 : vector<8x1xf32>
    %12 = arith.mulf %2, %6 : vector<8x1xf32>
    %cst_7 = arith.constant 1.000000e+00 : f32
    %13 = vector.broadcast %cst_7 : f32 to vector<8x1xf32>
    %14 = arith.subf %13, %2 : vector<8x1xf32>
    %15 = arith.mulf %14, %11 : vector<8x1xf32>
    %16 = arith.mulf %15, %11 : vector<8x1xf32>
    %17 = arith.addf %12, %16 : vector<8x1xf32>
    %18 = vector.shape_cast %17 : vector<8x1xf32> to vector<1x8x1xf32>
    %cst_8 = arith.constant dense<0.000000e+00> : vector<1xf32>
    %19 = vector.multi_reduction <add>, %18, %cst_8 [1, 2] : vector<1x8x1xf32> to vector<1xf32>
    %20 = vector.shape_cast %19 : vector<1xf32> to vector<1x1x1xf32>
    %21 = vector.extract %20[0, 0, 0] : f32 from vector<1x1x1xf32>
    %22 = vector.broadcast %21 : f32 to vector<1x1x1xf32>
    %c0_9 = arith.constant 0 : index
    %c0_10 = arith.constant 0 : index
    %c0_11 = arith.constant 0 : index
    %23 = vector.load %arg4[%c0_9, %c0_10, %c0_11] : memref<1x1x1xf32, #tpu.memory_space<vmem>>, vector<1x1x1xf32>
    tpu.vector_store %arg4[%c0_9, %c0_10, %c0_11], %22 {strides = array<i32>} : memref<1x1x1xf32, #tpu.memory_space<vmem>>, vector<1x1x1xf32>,
    return
  }
  func.func @transform_0(%arg0: i32) -> (i32, i32) {
    %c0_i32 = arith.constant 0 : i32
    %c0_i32_0 = arith.constant 0 : i32
    return %arg0, %c0_i32 : i32, i32
  }
  func.func @transform_1(%arg0: i32) -> (i32, i32) {
    %c0_i32 = arith.constant 0 : i32
    %c0_i32_0 = arith.constant 0 : i32
    return %arg0, %c0_i32 : i32, i32
  }
  func.func @transform_2(%arg0: i32) -> (i32, i32) {
    %c0_i32 = arith.constant 0 : i32
    %c0_i32_0 = arith.constant 0 : i32
    return %arg0, %c0_i32 : i32, i32
  }
  func.func @transform_3(%arg0: i32) -> (i32, i32, i32) {
    %c0_i32 = arith.constant 0 : i32
    %c0_i32_0 = arith.constant 0 : i32
    %c0_i32_1 = arith.constant 0 : i32
    return %arg0, %c0_i32, %c0_i32_0 : i32, i32, i32
  }
}

</mosaic_0001>

<llo_original>
// kernel: tpu_custom_call.1
$region0: #{tpu_custom_call.1}
  #allocation0 [shape = 'u32[]', space=smem, size = 0x4, offset = 0x4, fixed_abs, tag = 'smem constant byte address 0x4 - core index']
  #allocation1 [shape = 'u32[72,128]{1,0:T(1,128)}', space=vmem, size = 0x9000, scoped, tag = 'internal scratch']
  %s0 = inlined_call_operand.vmem [shape: f32[8,32], index: 0, kind: input, shape index: {}]
  %s1 = inlined_call_operand.hbm [shape: f32[8,32], index: 1, kind: input, shape index: {}]
  %s2 = inlined_call_operand.vmem [shape: f32[8,1], index: 2, kind: input, shape index: {}]
  %s3 = inlined_call_operand.hbm [shape: f32[1,1,1], index: 3, kind: output, shape index: {}]
  %s4 = sld [smem:[#allocation0]]
  $region26: #{tpu_custom_call.1} parent=0
    _
  %s6 = ssub.s32 1, %s4
  %s7 = scalar_select 0, %s6, %s4
  $region1: #{tpu_custom_call.1} parent=0
    #allocation2 [shape = 'u8[4096]{0}', space=vmem, size = 0x1000, scoped, tag = 'input window, operand 1, single buffered']
    #allocation3 [shape = 's32[1]{0}', space=sflag, size = 0x4, scoped, tag = 'scoped memory for tpu_custom_call.1']
    #allocation4 [shape = 's32[1]{0}', space=sflag, size = 0x4, scoped, tag = 'scoped memory for tpu_custom_call.1']
    #allocation5 [shape = 'u8[512]{0}', space=vmem, size = 0x400, scoped, tag = 'output window, operand 0, single buffered']
    %8 = vsyncpa [#allocation3], 0
    %9 = vsyncpa [#allocation4], 0
    // Predicated region
    $region2: #{tpu_custom_call.1} parent=1 // pred_check
      _
    $region3: #{tpu_custom_call.1} parent=1 // pred_check_branch
      %11 = sbr.rel (0) target = $region5
    $region4: #{tpu_custom_call.1} parent=1 // pred_region
      _
    $region5: #{tpu_custom_call.1} parent=1 // pred_fallthru
      _
    // Predicated region
    $region6: #{tpu_custom_call.1} parent=1 // pred_check
      _
    $region7: #{tpu_custom_call.1} parent=1 // pred_check_branch
      %13 = sbr.rel (0) target = $region9
    $region8: #{tpu_custom_call.1} parent=1 // pred_region
      %15 = vsyncadd [#allocation3], 0
      %s17 = sshll.u32 %s1, 4
      %s18 = int_to_ptr.hbm [resolvable:$true] %s17
      %s19 = sshll.u32 [#allocation2], 4
      %s20 = int_to_ptr.vmem [resolvable:$true] %s19
      %22 = dma.hbm_to_vmem [thread:$0]  %s18, 128, %s20, [#allocation3]
    $region9: #{tpu_custom_call.1} parent=1 // pred_fallthru
      _
    // Predicated region
    $region10: #{tpu_custom_call.1} parent=1 // pred_check
      _
    $region11: #{tpu_custom_call.1} parent=1 // pred_check_branch
      %24 = sbr.rel (0) target = $region13
    $region12: #{tpu_custom_call.1} parent=1 // pred_region
      _
    $region13: #{tpu_custom_call.1} parent=1 // pred_fallthru
      _
    // Predicated region
    $region14: #{tpu_custom_call.1} parent=1 // pred_check
      _
    $region15: #{tpu_custom_call.1} parent=1 // pred_check_branch
      %26 = sbr.rel (0) target = $region17
    $region16: #{tpu_custom_call.1} parent=1 // pred_region
      %28 = dma.done [#allocation3], 128
    $region17: #{tpu_custom_call.1} parent=1 // pred_fallthru
      _
    %v29 = vld [vmem:[%s0] sm:$0xff]
    %v30 = vld [vmem:[#allocation2] sm:$0xff]
    %v31 = vld [vmem:[%s2] sm:$0xff]
    %v32 = vsub.f32 %v29, %v30
    %v33 = vmul.f32 %v32, %v32
    %vm34 = vcmask 261120
    %v35 = vsel %vm34, %v33, 0.0
    %36 = vadd.xlane.f32.xlu0 %v35
    %v37 = vpop.xlane.xlu0 %36
    %v38 = vrsqrt.pop %v37
    %v39 = vmul.f32 %v38, %v37
    %v40 = vmul.f32 %v39, %v38
    %v41 = vmul.f32 0.5, %v40
    %v42 = vsub.f32 1.5, %v41
    %v43 = vmul.f32 %v38, %v42
    %v44 = vmul.f32 %v37, %v43
    %vm45 = vcmp.eq.f32.partialorder %v37, inf
    %v46 = vsel %vm45, %v37, %v44
    %vm47 = vcmp.eq.f32.partialorder %v37, 0.0
    %v48 = vand.u32 %v37, 2147483648
    %v49 = vsel %vm47, %v48, %v46
    %v50 = vsub.f32 1.0, %v49
    %v51 = vmax.f32 %v50, 0.0
    %v52 = vmul.f32 %v31, %v37
    %v53 = vsub.f32 1.0, %v31
    %v54 = vmul.f32 %v53, %v51
    %v55 = vmul.f32 %v54, %v51
    %v56 = vadd.f32 %v52, %v55
    %vm57 = vcmask 7168
    %v58 = vsel %vm57, %v56, 0.0
    %59 = vadd.xlane.f32.xlu0 %v58
    %v60 = vpop.xlane.xlu0 %59
    %v61 = vrot.slane %v60, 4
    %v62 = vadd.f32 %v60, %v61
    %v63 = vrot.slane %v62, 2
    %v64 = vadd.f32 %v62, %v63
    %v65 = vrot.slane %v64, 1
    %v66 = vadd.f32 %v64, %v65
    %s67 = vtos %v66
    %v68 = vstv %s67
    %vm69 = vcmask 0
    %70 = vst.msk [vmem:[#allocation5] sm:$0x1] %vm69, %v68
    // Predicated region
    $region18: #{tpu_custom_call.1} parent=1 // pred_check
      _
    $region19: #{tpu_custom_call.1} parent=1 // pred_check_branch
      %72 = sbr.rel (0) target = $region21
    $region20: #{tpu_custom_call.1} parent=1 // pred_region
      %74 = vsyncadd [#allocation4], 0
      %s76 = sshll.u32 [#allocation5], 4
      %s77 = int_to_ptr.vmem [resolvable:$true] %s76
      %s78 = sshll.u32 %s3, 4
      %s79 = int_to_ptr.hbm [resolvable:$true] %s78
      %81 = dma.vmem_to_hbm [thread:$0]  %s77, 16, %s79, [#allocation4]
    $region21: #{tpu_custom_call.1} parent=1 // pred_fallthru
      _
    // Predicated region
    $region22: #{tpu_custom_call.1} parent=1 // pred_check
      _
    $region23: #{tpu_custom_call.1} parent=1 // pred_check_branch
      %83 = sbr.rel (0) target = $region25
    $region24: #{tpu_custom_call.1} parent=1 // pred_region
      %85 = dma.done [#allocation4], 16
    $region25: #{tpu_custom_call.1} parent=1 // pred_fallthru
      _
    %86 = vsyncpa [#allocation3], 1
    %87 = vsyncpa [#allocation4], 1

</llo_original>
